<compile_context>
chip_gen: v5e
topology: v5e:2x2
jax: 0.10.0
libtpu: 0.0.40
codegen_flags: <defaults>
</compile_context>

<pallas_src>
import jax
import jax.numpy as jnp
from jax.experimental import pallas as pl
from jax.experimental.pallas import tpu as pltpu


def _round_up(x, m):
    return ((x + m - 1) // m) * m


# ----------------------------- Pallas kernels ------------------------------

def voxel_mean_kernel(idx_ref, g_ref, o_ref):
    """Mean voxelization tile (PointGroup `voxelization(feats, v2p_map, 4)`).

    idx_ref: (tv, A) int32, -1 padded  -> defines validity mask AND the count
    g_ref:   (A, tv, C) f32            -> point features gathered per (slot, voxel)
    o_ref:   (tv, C) f32               -> out[v] = sum_valid / max(count, 1)
    """
    idx = idx_ref[...]
    valid = idx >= 0                                             # (tv, A)
    cnt = jnp.sum(valid.astype(jnp.float32), axis=1, keepdims=True)  # (tv, 1)
    tv, c = o_ref.shape
    acc = jnp.zeros((tv, c), jnp.float32)
    for s in range(idx.shape[1]):                                # A is tiny & static
        acc = acc + jnp.where(valid[:, s:s + 1], g_ref[s], 0.0)
    inv = pl.reciprocal(jnp.maximum(cnt, 1.0), approx=True)      # EUP slot, ~free
    o_ref[...] = acc * inv


def fused_mlp_kernel(x_ref, w1_ref, b1_ref, w2_ref, b2_ref, o_ref):
    """o = relu(x @ w1 + b1) @ w2 + b2 — hidden stays in VMEM, no HBM round trip.
    x/w1/w2 are bf16, accumulation in f32, output lane width padded to 128."""
    h = jnp.dot(x_ref[...], w1_ref[...], preferred_element_type=jnp.float32)
    h = jnp.maximum(h + b1_ref[...], 0.0)
    o_ref[...] = (jnp.dot(h.astype(w2_ref.dtype), w2_ref[...],
                          preferred_element_type=jnp.float32) + b2_ref[...])


# ------------------------------- wrappers -----------------------------------

def voxelize_mean(point_feats, v2p_idx, *, block_v=512):
    """point_feats: (P, C) f32, v2p_idx: (V, A) int32 (-1 padded) -> (V, C) f32.

    XLA performs the data-dependent row gather (points generally exceed VMEM);
    the Pallas kernel does masked-sum + count + reciprocal, tiled over V.
    """
    P, C = point_feats.shape
    V, A = v2p_idx.shape
    block_v = _round_up(block_v, 8)
    tv = min(block_v, _round_up(V, 8))
    V_pad = _round_up(V, tv)

    idx = v2p_idx
    if V_pad != V:
        idx = jnp.pad(idx, ((0, V_pad - V), (0, 0)), constant_values=-1)

    safe = jnp.maximum(idx, 0).reshape(-1)                       # (V_pad*A,)
    gathered = jnp.take(point_feats, safe, axis=0)               # XLA gather
    gathered = gathered.reshape(V_pad, A, C).transpose(1, 0, 2)  # (A, V_pad, C)

    out = pl.pallas_call(
        voxel_mean_kernel,
        out_shape=jax.ShapeDtypeStruct((V_pad, C), jnp.float32),
        grid=(V_pad // tv,),
        in_specs=[pl.BlockSpec((tv, A), lambda i: (i, 0)),
                  pl.BlockSpec((A, tv, C), lambda i: (0, i, 0))],
        out_specs=pl.BlockSpec((tv, C), lambda i: (i, 0)),
        # V tiles are independent -> megacore-shardable (matters on v7x 2 TCs).
        compiler_params=pltpu.CompilerParams(
            dimension_semantics=("parallel",)),
    )(idx, gathered)
    return out[:V]


def fused_mlp(x, w1, b1, w2, b2, num_out, *, block_m=512):
    """relu(x @ w1 + b1) @ w2[:, :num_out] + b2 — one fused Pallas call.

    x: (M, K) bf16, w1: (K, H) bf16, b1: (H,) f32, w2: (H, num_out) bf16,
    b2: (num_out,) f32.  Output is computed lane-padded to 128 and sliced.
    For much larger tiles raise pltpu.CompilerParams(vmem_limit_bytes=...)
    (v5e default scoped VMEM is only 16 MiB; v7x physical VMEM is 64 MiB).
    """
    M, K = x.shape
    H = w1.shape[1]
    N_pad = _round_up(num_out, 128)
    block_m = _round_up(block_m, 8)
    tm = min(block_m, _round_up(M, 8))
    M_pad = _round_up(M, tm)

    if M_pad != M:
        x = jnp.pad(x, ((0, M_pad - M), (0, 0)))
    w2p = jnp.pad(w2, ((0, 0), (0, N_pad - num_out)))            # zero lanes
    b2p = jnp.pad(b2, (0, N_pad - num_out)).reshape(1, N_pad)
    b1r = b1.reshape(1, H)

    out = pl.pallas_call(
        fused_mlp_kernel,
        out_shape=jax.ShapeDtypeStruct((M_pad, N_pad), jnp.float32),
        grid=(M_pad // tm,),
        in_specs=[pl.BlockSpec((tm, K), lambda i: (i, 0)),
                  pl.BlockSpec((K, H), lambda i: (0, 0)),
                  pl.BlockSpec((1, H), lambda i: (0, 0)),
                  pl.BlockSpec((H, N_pad), lambda i: (0, 0)),
                  pl.BlockSpec((1, N_pad), lambda i: (0, 0))],
        out_specs=pl.BlockSpec((tm, N_pad), lambda i: (i, 0)),
        compiler_params=pltpu.CompilerParams(
            dimension_semantics=("parallel",)),
    )(x, w1, b1r, w2p, b2p)
    return out[:M, :num_out]


# ----------------------------- Semantic model -------------------------------

class SemanticPallas:
    """Eval-mode forward of `Semantic` (aux_module is training-only -> None)."""

    def __init__(self, key, *, use_coords=True, input_channel=True,
                 backbone_channels=32, num_class=8):
        self.use_coords = use_coords
        self.num_class = num_class
        in_channel = 6 if input_channel else 3
        k1, k2, k3, k4 = jax.random.split(key, 4)
        # Stand-in backbone projection (real backbone is a sparse conv U-Net).
        self.w_backbone = (0.1 * jax.random.normal(
            k1, (in_channel, backbone_channels), jnp.float32)).astype(jnp.bfloat16)
        self.b_backbone = 0.01 * jax.random.normal(
            k2, (backbone_channels,), jnp.float32)
        # self.classifier = nn.Linear(output_channels, num_class)
        self.w_cls = (0.1 * jax.random.normal(
            k3, (backbone_channels, num_class), jnp.float32)).astype(jnp.bfloat16)
        self.b_cls = 0.01 * jax.random.normal(k4, (num_class,), jnp.float32)

    def __call__(self, batch, *, block_v=512, block_m=512):
        offsets = batch["offsets"]                       # (B+1,) int32
        batch_size = offsets.shape[0] - 1

        feats = batch["feats"]                           # (P, 3) f32
        coords_float = batch["locs_float"]               # (P, 3) f32
        point_feats = (jnp.concatenate((feats, coords_float), axis=1)
                       if self.use_coords else feats)    # (P, 6)

        # voxelization(point_feats, v2p_map, 4)  -> Pallas masked-mean kernel
        voxel_feats = voxelize_mean(point_feats, batch["v2p_idx"],
                                    block_v=block_v)     # (V, 6)

        # batch['points'] = cat(locs[:, :1], coords_float)
        points = jnp.concatenate(
            (batch["locs"][:, :1].astype(coords_float.dtype), coords_float),
            axis=1)

        # TODO(synk): the sparse-3D-conv backbone (+ optional neck) has no clean
        # Pallas equivalent; stand-in: since the eval path only consumes
        # query_features, gather the query voxel rows FIRST, then run one fused
        # Linear+ReLU -> classifier Pallas kernel on those rows only.
        q_idx = batch["query_sampled_indices"]           # (B, Nq) int32
        V = voxel_feats.shape[0]
        q_rows = (q_idx % V).reshape(-1)                 # stand-in query->voxel map
        q_feats = voxel_feats[q_rows].astype(jnp.bfloat16)   # (B*Nq, 6)

        # scores = self.classifier(relu(backbone_proj(query_features)))
        scores = fused_mlp(q_feats, self.w_backbone, self.b_backbone,
                           self.w_cls, self.b_cls, self.num_class,
                           block_m=block_m)              # (B*Nq, num_class) f32

        # aux branch only runs when self.training -> eval forward returns None
        aux_scores = None

        # sampled_indices = (idx + offsets[:-1].view(-1, 1)).view(-1)
        sampled_indices = (q_idx + offsets[:-1][:, None]).reshape(-1)
        del batch_size  # shape bookkeeping only

        return scores, aux_scores, sampled_indices, points


# --------------------------------- main --------------------------------------

if __name__ == "__main__":
    key = jax.random.PRNGKey(0)
    k_feats, k_coords, k_qidx, k_model = jax.random.split(key, 4)

    B = 2                 # batch size
    P_per = 128           # points per sample
    P = B * P_per         # 256 points total
    V = 128               # voxels
    A = 4                 # max points per voxel (v2p map width)
    NQ = 8                # sampled queries per sample
    NUM_CLASS = 8

    feats = jax.random.normal(k_feats, (P, 3), jnp.float32)
    locs_float = jax.random.uniform(k_coords, (P, 3), jnp.float32) * 20.0
    batch_ids = jnp.repeat(jnp.arange(B, dtype=jnp.int32), P_per)
    locs = jnp.concatenate(
        [batch_ids[:, None],
         (locs_float * 10.0).astype(jnp.int32)], axis=1)             # (P, 4)

    # Deterministic v2p map: first half of voxels get 2 points, second half 1.
    v_ids = jnp.arange(V, dtype=jnp.int32)
    half = V // 2
    slot0 = jnp.where(v_ids < half, 2 * v_ids, V + v_ids)
    slot1 = jnp.where(v_ids < half, 2 * v_ids + 1, -1)
    pad = -jnp.ones((V, A - 2), jnp.int32)
    v2p_idx = jnp.concatenate([slot0[:, None], slot1[:, None], pad], axis=1)

    offsets = jnp.array([0, P_per, 2 * P_per], jnp.int32)            # (B+1,)
    query_sampled_indices = jax.random.randint(
        k_qidx, (B, NQ), 0, P_per, dtype=jnp.int32)

    batch = dict(feats=feats, locs_float=locs_float, locs=locs,
                 v2p_idx=v2p_idx, offsets=offsets,
                 query_sampled_indices=query_sampled_indices,
                 spatial_shape=jnp.array([512, 512, 512], jnp.int32))

    model = SemanticPallas(k_model, use_coords=True, input_channel=True,
                           backbone_channels=32, num_class=NUM_CLASS)

    # block_v=64 -> 2 voxel tiles; block_m=8 -> 2 query-row tiles (real sizes
    # would use the 512-default or larger).
    scores, aux_scores, sampled_indices, points = model(
        batch, block_v=64, block_m=8)
    jax.block_until_ready(scores)
    jax.block_until_ready(sampled_indices)

    # ------------------- pure-JAX reference of the compute path ---------------
    pf = jnp.concatenate((feats, locs_float), axis=1)
    mask = v2p_idx >= 0
    g = pf[jnp.maximum(v2p_idx, 0)]                                  # (V, A, 6)
    g = jnp.where(mask[..., None], g, 0.0)
    cnt = jnp.maximum(mask.sum(1, keepdims=True).astype(jnp.float32), 1.0)
    vf_ref = g.sum(1) / cnt
    vf_pallas = voxelize_mean(pf, v2p_idx, block_v=64)
    assert jnp.allclose(vf_pallas, vf_ref, atol=1e-2, rtol=1e-2)

    qf_ref = vf_ref[(query_sampled_indices % V).reshape(-1)].astype(jnp.bfloat16)
    h_ref = jnp.maximum(
        jnp.dot(qf_ref, model.w_backbone,
                preferred_element_type=jnp.float32) + model.b_backbone, 0.0)
    scores_ref = jnp.dot(h_ref.astype(jnp.bfloat16), model.w_cls,
                         preferred_element_type=jnp.float32) + model.b_cls

    assert scores.shape == (B * NQ, NUM_CLASS)
    assert aux_scores is None
    assert sampled_indices.shape == (B * NQ,)
    assert points.shape == (P, 4)
    assert jnp.allclose(scores, scores_ref, atol=2e-2, rtol=2e-2)

    print("KERNEL_OK")
</pallas_src>

<mosaic_0001>
module attributes {stable_mosaic.version = 11 : i64} {
  func.func @voxel_mean_kernel(%arg0: i32, %arg1: memref<64x4xi32, #tpu.memory_space<vmem>>, %arg2: memref<4x64x6xf32, #tpu.memory_space<vmem>>, %arg3: memref<64x6xf32, #tpu.memory_space<vmem>>) attributes {dimension_semantics = [#tpu.dimension_semantics<parallel>], iteration_bounds = array<i64: 2>, scalar_prefetch = 0 : i64, scratch_operands = 0 : i64, tpu.core_type = #tpu.core_type<tc>, window_params = [{transform_indices = @transform_0, window_bounds = array<i64: 64, 4>}, {transform_indices = @transform_1, window_bounds = array<i64: 4, 64, 6>}, {transform_indices = @transform_2, window_bounds = array<i64: 64, 6>}]} {
    %c0 = arith.constant 0 : index
    %c0_0 = arith.constant 0 : index
    %0 = vector.load %arg1[%c0, %c0_0] : memref<64x4xi32, #tpu.memory_space<vmem>>, vector<64x4xi32>
    %c0_i32 = arith.constant 0 : i32
    %1 = vector.broadcast %c0_i32 : i32 to vector<64x4xi32>
    %2 = arith.cmpi sge, %0, %1 : vector<64x4xi32>
    %3 = arith.extui %2 : vector<64x4xi1> to vector<64x4xi32>
    %4 = arith.sitofp %3 : vector<64x4xi32> to vector<64x4xf32>
    %cst = arith.constant dense<0.000000e+00> : vector<64xf32>
    %5 = vector.multi_reduction <add>, %4, %cst [1] : vector<64x4xf32> to vector<64xf32>
    %6 = vector.shape_cast %5 : vector<64xf32> to vector<64x1xf32>
    %cst_1 = arith.constant 0.000000e+00 : f32
    %7 = vector.broadcast %cst_1 : f32 to vector<64x6xf32>
    %8 = vector.extract_strided_slice %2 {offsets = [0, 0], sizes = [64, 1], strides = [1, 1]} : vector<64x4xi1> to vector<64x1xi1>
    %c0_2 = arith.constant 0 : index
    %c0_3 = arith.constant 0 : index
    %c0_4 = arith.constant 0 : index
    %9 = vector.load %arg2[%c0_2, %c0_3, %c0_4] : memref<4x64x6xf32, #tpu.memory_space<vmem>>, vector<1x64x6xf32>
    %10 = vector.shape_cast %9 : vector<1x64x6xf32> to vector<64x6xf32>
    %cst_5 = arith.constant 0.000000e+00 : f32
    %11 = vector.shape_cast %8 : vector<64x1xi1> to vector<64x1xi1>
    %12 = vector.broadcast %11 : vector<64x1xi1> to vector<64x6xi1>
    %13 = vector.broadcast %cst_5 : f32 to vector<64x6xf32>
    %14 = arith.select %12, %10, %13 : vector<64x6xi1>, vector<64x6xf32>
    %15 = arith.addf %7, %14 : vector<64x6xf32>
    %16 = vector.extract_strided_slice %2 {offsets = [0, 1], sizes = [64, 1], strides = [1, 1]} : vector<64x4xi1> to vector<64x1xi1>
    %c1 = arith.constant 1 : index
    %c0_6 = arith.constant 0 : index
    %c0_7 = arith.constant 0 : index
    %17 = vector.load %arg2[%c1, %c0_6, %c0_7] : memref<4x64x6xf32, #tpu.memory_space<vmem>>, vector<1x64x6xf32>
    %18 = vector.shape_cast %17 : vector<1x64x6xf32> to vector<64x6xf32>
    %cst_8 = arith.constant 0.000000e+00 : f32
    %19 = vector.shape_cast %16 : vector<64x1xi1> to vector<64x1xi1>
    %20 = vector.broadcast %19 : vector<64x1xi1> to vector<64x6xi1>
    %21 = vector.broadcast %cst_8 : f32 to vector<64x6xf32>
    %22 = arith.select %20, %18, %21 : vector<64x6xi1>, vector<64x6xf32>
    %23 = arith.addf %15, %22 : vector<64x6xf32>
    %24 = vector.extract_strided_slice %2 {offsets = [0, 2], sizes = [64, 1], strides = [1, 1]} : vector<64x4xi1> to vector<64x1xi1>
    %c2 = arith.constant 2 : index
    %c0_9 = arith.constant 0 : index
    %c0_10 = arith.constant 0 : index
    %25 = vector.load %arg2[%c2, %c0_9, %c0_10] : memref<4x64x6xf32, #tpu.memory_space<vmem>>, vector<1x64x6xf32>
    %26 = vector.shape_cast %25 : vector<1x64x6xf32> to vector<64x6xf32>
    %cst_11 = arith.constant 0.000000e+00 : f32
    %27 = vector.shape_cast %24 : vector<64x1xi1> to vector<64x1xi1>
    %28 = vector.broadcast %27 : vector<64x1xi1> to vector<64x6xi1>
    %29 = vector.broadcast %cst_11 : f32 to vector<64x6xf32>
    %30 = arith.select %28, %26, %29 : vector<64x6xi1>, vector<64x6xf32>
    %31 = arith.addf %23, %30 : vector<64x6xf32>
    %32 = vector.extract_strided_slice %2 {offsets = [0, 3], sizes = [64, 1], strides = [1, 1]} : vector<64x4xi1> to vector<64x1xi1>
    %c3 = arith.constant 3 : index
    %c0_12 = arith.constant 0 : index
    %c0_13 = arith.constant 0 : index
    %33 = vector.load %arg2[%c3, %c0_12, %c0_13] : memref<4x64x6xf32, #tpu.memory_space<vmem>>, vector<1x64x6xf32>
    %34 = vector.shape_cast %33 : vector<1x64x6xf32> to vector<64x6xf32>
    %cst_14 = arith.constant 0.000000e+00 : f32
    %35 = vector.shape_cast %32 : vector<64x1xi1> to vector<64x1xi1>
    %36 = vector.broadcast %35 : vector<64x1xi1> to vector<64x6xi1>
    %37 = vector.broadcast %cst_14 : f32 to vector<64x6xf32>
    %38 = arith.select %36, %34, %37 : vector<64x6xi1>, vector<64x6xf32>
    %39 = arith.addf %31, %38 : vector<64x6xf32>
    %cst_15 = arith.constant 1.000000e+00 : f32
    %40 = vector.broadcast %cst_15 : f32 to vector<64x1xf32>
    %41 = arith.maximumf %6, %40 : vector<64x1xf32>
    %42 = tpu.reciprocal %41 {approx = true} : vector<64x1xf32> -> vector<64x1xf32>
    %43 = vector.broadcast %42 : vector<64x1xf32> to vector<64x6xf32>
    %44 = arith.mulf %39, %43 : vector<64x6xf32>
    %c0_16 = arith.constant 0 : index
    %c0_17 = arith.constant 0 : index
    %45 = vector.load %arg3[%c0_16, %c0_17] : memref<64x6xf32, #tpu.memory_space<vmem>>, vector<64x6xf32>
    tpu.vector_store %arg3[%c0_16, %c0_17], %44 {strides = array<i32>} : memref<64x6xf32, #tpu.memory_space<vmem>>, vector<64x6xf32>,
    return
  }
  func.func @transform_0(%arg0: i32) -> (i32, i32) {
    %c0_i32 = arith.constant 0 : i32
    %c0_i32_0 = arith.constant 0 : i32
    return %arg0, %c0_i32 : i32, i32
  }
  func.func @transform_1(%arg0: i32) -> (i32, i32, i32) {
    %c0_i32 = arith.constant 0 : i32
    %c0_i32_0 = arith.constant 0 : i32
    %c0_i32_1 = arith.constant 0 : i32
    return %c0_i32, %arg0, %c0_i32_0 : i32, i32, i32
  }
  func.func @transform_2(%arg0: i32) -> (i32, i32) {
    %c0_i32 = arith.constant 0 : i32
    %c0_i32_0 = arith.constant 0 : i32
    return %arg0, %c0_i32 : i32, i32
  }
}

</mosaic_0001>

<llo_original>
// kernel: tpu_custom_call.1
$region0: #{tpu_custom_call.1}
  #allocation0 [shape = 'u32[]', space=smem, size = 0x4, offset = 0x4, fixed_abs, tag = 'smem constant byte address 0x4 - core index']
  #allocation1 [shape = 'u32[72,128]{1,0:T(1,128)}', space=vmem, size = 0x9000, scoped, tag = 'internal scratch']
  %s0 = inlined_call_operand.vmem [shape: s32[128,4], index: 0, kind: input, shape index: {}]
  %s1 = inlined_call_operand.vmem [shape: f32[4,128,6], index: 1, kind: input, shape index: {}]
  %s2 = inlined_call_operand.vmem [shape: f32[128,6], index: 2, kind: output, shape index: {}]
  %s3 = sld [smem:[#allocation0]]
  $region79: #{tpu_custom_call.1} parent=0
    _
  %s5 = ssub.s32 1, %s3
  %s6 = scalar_select 0, %s5, %s3
  $region1: #{tpu_custom_call.1} parent=0
    #allocation2 [shape = 'u8[262144]{0}', space=vmem, size = 0x40000, scoped, tag = 'input window, operand 1']
    loop: start=0, step=1, limit=4
    $region2: #{tpu_custom_call.1} parent=1 // loop_pre_header
      _
    $region3: #{tpu_custom_call.1} parent=1 // loop_header
      %s8 = sphi 0, %s12
      %p9 = scmp.ge.s32.totalorder %s8, 4
      %s18 = sphi 0, %s20
      %s21 = sphi 0, %s18
      %s22 = sphi 0, %s21
      %s38 = sphi 0, %s22
      %s44 = sphi 0, %s46
      %s47 = sphi 0, %s44
      %s48 = sphi 0, %s47
      %s64 = sphi 0, %s48
      %s70 = sphi 0, %s72
      %s73 = sphi 0, %s70
      %s74 = sphi 0, %s73
      %s90 = sphi 0, %s74
    $region4: #{tpu_custom_call.1} parent=1 // loop_header_branch
      %11 = sbr.rel (%p9) target = $region8
    $region5: #{tpu_custom_call.1} parent=1 // loop_body
      %s13 = ssub.s32 %s8, 1
      %s14 = ssub.s32 %s8, 2
      %s15 = sadd.s32 %s8, 1
      %s16 = ssub.s32 %s8, %s15
      %p17 = scmp.eq.s32.totalorder %s16, 0
      %s19 = sadd.s32 %s18, 1
      %s20 = scalar_select %p17, %s18, %s19
      %p23 = pneg %p17
      %p24 = scmp.eq.s32.totalorder %s8, 1
      %p25 = por %p23, %p24
      %p26 = scmp.ne.s32.totalorder %s18, %s21
      %p27 = scmp.eq.s32.totalorder %s8, 0
      %p28 = por %p26, %p27
      %p29 = scmp.ne.s32.totalorder %s18, %s21
      %p30 = scmp.eq.s32.totalorder %s13, 1
      %p31 = por %p29, %p30
      %p32 = scmp.ne.s32.totalorder %s21, %s22
      %p33 = scmp.eq.s32.totalorder %s13, 0
      %p34 = por %p32, %p33
      %p35 = scmp.ne.s32.totalorder %s21, %s22
      %p36 = scmp.eq.s32.totalorder %s14, 1
      %p37 = por %p35, %p36
      %p39 = scmp.ne.s32.totalorder %s22, %s38
      %p40 = scmp.eq.s32.totalorder %s14, 0
      %p41 = por %p39, %p40
      %s42 = ssub.s32 %s8, %s15
      %p43 = scmp.eq.s32.totalorder %s42, 0
      %s45 = sadd.s32 %s44, 1
      %s46 = scalar_select %p43, %s44, %s45
      %p49 = pneg %p43
      %p50 = scmp.eq.s32.totalorder %s8, 1
      %p51 = por %p49, %p50
      %p52 = scmp.ne.s32.totalorder %s44, %s47
      %p53 = scmp.eq.s32.totalorder %s8, 0
      %p54 = por %p52, %p53
      %p55 = scmp.ne.s32.totalorder %s44, %s47
      %p56 = scmp.eq.s32.totalorder %s13, 1
      %p57 = por %p55, %p56
      %p58 = scmp.ne.s32.totalorder %s47, %s48
      %p59 = scmp.eq.s32.totalorder %s13, 0
      %p60 = por %p58, %p59
      %p61 = scmp.ne.s32.totalorder %s47, %s48
      %p62 = scmp.eq.s32.totalorder %s14, 1
      %p63 = por %p61, %p62
      %p65 = scmp.ne.s32.totalorder %s48, %s64
      %p66 = scmp.eq.s32.totalorder %s14, 0
      %p67 = por %p65, %p66
      %s68 = ssub.s32 %s8, %s15
      %p69 = scmp.eq.s32.totalorder %s68, 0
      %s71 = sadd.s32 %s70, 1
      %s72 = scalar_select %p69, %s70, %s71
      %p75 = pneg %p69
      %p76 = scmp.eq.s32.totalorder %s8, 1
      %p77 = por %p75, %p76
      %p78 = scmp.ne.s32.totalorder %s70, %s73
      %p79 = scmp.eq.s32.totalorder %s8, 0
      %p80 = por %p78, %p79
      %p81 = scmp.ne.s32.totalorder %s70, %s73
      %p82 = scmp.eq.s32.totalorder %s13, 1
      %p83 = por %p81, %p82
      %p84 = scmp.ne.s32.totalorder %s73, %s74
      %p85 = scmp.eq.s32.totalorder %s13, 0
      %p86 = por %p84, %p85
      %p87 = scmp.ne.s32.totalorder %s73, %s74
      %p88 = scmp.eq.s32.totalorder %s14, 1
      %p89 = por %p87, %p88
      %p91 = scmp.ne.s32.totalorder %s74, %s90
      %p92 = scmp.eq.s32.totalorder %s14, 0
      %p93 = por %p91, %p92
      %p94 = scmp.le.s32.totalorder 1, %s8
      %p95 = scmp.lt.s32.totalorder %s8, 3
      %p96 = pnand %p94, %p95
      %p97 = pneg %p96
      // Predicated region
      $region9: #{tpu_custom_call.1} parent=5 // pred_check
        _
      $region10: #{tpu_custom_call.1} parent=5 // pred_check_branch
        %99 = sbr.rel (%p96) target = $region12
      $region11: #{tpu_custom_call.1} parent=5 // pred_region
        %s100 = ssub.s32 %s8, 1
      $region12: #{tpu_custom_call.1} parent=5 // pred_fallthru
        _
      %p101 = scmp.lt.s32.totalorder %s8, 2
      // Predicated region
      $region13: #{tpu_custom_call.1} parent=5 // pred_check
        %p102 = pneg %p101
      $region14: #{tpu_custom_call.1} parent=5 // pred_check_branch
        %104 = sbr.rel (%p102) target = $region16
      $region15: #{tpu_custom_call.1} parent=5 // pred_region
        // Predicated region
        $region17: #{tpu_custom_call.1} parent=15 // pred_check
          %p105 = pneg %p28
        $region18: #{tpu_custom_call.1} parent=15 // pred_check_branch
          %107 = sbr.rel (%p105) target = $region20
        $region19: #{tpu_custom_call.1} parent=15 // pred_region
          %s108 = smul.u32 8, %s8
          %p109 = scmp.lt.s32.totalorder %s108, 15
          %s110 = scalar_select %p109, %s108, 15
          %s111 = smul.addr %s110, 8
          %s112 = scalar_lea.vmem %s0, %s111
          %s113 = smul.u32 8, %s8
        $region20: #{tpu_custom_call.1} parent=15 // pred_fallthru
          _
        // Predicated region
        $region21: #{tpu_custom_call.1} parent=15 // pred_check
          %p114 = pneg %p54
        $region22: #{tpu_custom_call.1} parent=15 // pred_check_branch
          %116 = sbr.rel (%p114) target = $region24
        $region23: #{tpu_custom_call.1} parent=15 // pred_region
          %s117 = sand.u32 %s44, 1
          %s118 = sand.u32 %s44, 1
          %s119 = smul.addr %s118, 256
          %s120 = scalar_lea.vmem [#allocation2], %s119
          %s121 = smul.u32 8, %s8
          %s122 = smul.addr %s121, 8
          %s123 = scalar_lea.vmem %s1, %s122
          // Predicated region
          $region25: #{tpu_custom_call.1} parent=23 // pred_check
            _
          $region26: #{tpu_custom_call.1} parent=23 // pred_check_branch
            %125 = sbr.rel (0) target = $region28
          $region27: #{tpu_custom_call.1} parent=23 // pred_region
            // Predicated region
            $region29: #{tpu_custom_call.1} parent=27 // pred_check
              _
            $region30: #{tpu_custom_call.1} parent=27 // pred_check_branch
              %127 = sbr.rel (0) target = $region32
            $region31: #{tpu_custom_call.1} parent=27 // pred_region
              // Predicated region
              $region44: #{tpu_custom_call.1} parent=31 // pred_check
                _
              $region45: #{tpu_custom_call.1} parent=31 // pred_check_branch
                %205 = sbr.rel (0) target = $region47
              $region46: #{tpu_custom_call.1} parent=31 // pred_region
                loop: start=0, step=1, limit=1
                $region48: #{tpu_custom_call.1} parent=46 // loop_pre_header
                  _
                $region49: #{tpu_custom_call.1} parent=46 // loop_header
                  %s207 = sphi 0, %s211
                  %p208 = scmp.ge.s32.totalorder %s207, 1
                  %s212 = sphi %s123, %s123
                  %s213 = sphi %s120, %s120
                $region50: #{tpu_custom_call.1} parent=46 // loop_header_branch
                  %210 = sbr.rel (%p208) target = $region54
                $region51: #{tpu_custom_call.1} parent=46 // loop_body
                  %v214 = vld [vmem:[%s212] sm:$0xff]
                  %215 = vst [vmem:[%s213] sm:$0xff] %v214
                  %v216 = vld [vmem:[%s212 + $0x8] sm:$0xff]
                  %217 = vst [vmem:[%s213 + $0x8] sm:$0xff] %v216
                  %v218 = vld [vmem:[%s212 + $0x10] sm:$0xff]
                  %219 = vst [vmem:[%s213 + $0x10] sm:$0xff] %v218
                  %v220 = vld [vmem:[%s212 + $0x18] sm:$0xff]
                  %221 = vst [vmem:[%s213 + $0x18] sm:$0xff] %v220
                  %v222 = vld [vmem:[%s212 + $0x20] sm:$0xff]
                  %223 = vst [vmem:[%s213 + $0x20] sm:$0xff] %v222
                  %v224 = vld [vmem:[%s212 + $0x28] sm:$0xff]
                  %225 = vst [vmem:[%s213 + $0x28] sm:$0xff] %v224
                  %v226 = vld [vmem:[%s212 + $0x30] sm:$0xff]
                  %227 = vst [vmem:[%s213 + $0x30] sm:$0xff] %v226
                  %v228 = vld [vmem:[%s212 + $0x38] sm:$0xff]
                  %229 = vst [vmem:[%s213 + $0x38] sm:$0xff] %v228
                  %v230 = vld [vmem:[%s212 + $0x80] sm:$0xff]
                  %231 = vst [vmem:[%s213 + $0x40] sm:$0xff] %v230
                  %v232 = vld [vmem:[%s212 + $0x88] sm:$0xff]
                  %233 = vst [vmem:[%s213 + $0x48] sm:$0xff] %v232
                  %v234 = vld [vmem:[%s212 + $0x90] sm:$0xff]
                  %235 = vst [vmem:[%s213 + $0x50] sm:$0xff] %v234
                  %v236 = vld [vmem:[%s212 + $0x98] sm:$0xff]
                  %237 = vst [vmem:[%s213 + $0x58] sm:$0xff] %v236
                  %v238 = vld [vmem:[%s212 + $0xa0] sm:$0xff]
                  %239 = vst [vmem:[%s213 + $0x60] sm:$0xff] %v238
                  %v240 = vld [vmem:[%s212 + $0xa8] sm:$0xff]
                  %241 = vst [vmem:[%s213 + $0x68] sm:$0xff] %v240
                  %v242 = vld [vmem:[%s212 + $0xb0] sm:$0xff]
                  %243 = vst [vmem:[%s213 + $0x70] sm:$0xff] %v242
                  %v244 = vld [vmem:[%s212 + $0xb8] sm:$0xff]
                  %245 = vst [vmem:[%s213 + $0x78] sm:$0xff] %v244
                  %v246 = vld [vmem:[%s212 + $0x100] sm:$0xff]
                  %247 = vst [vmem:[%s213 + $0x80] sm:$0xff] %v246
                  %v248 = vld [vmem:[%s212 + $0x108] sm:$0xff]
                  %249 = vst [vmem:[%s213 + $0x88] sm:$0xff] %v248
                  %v250 = vld [vmem:[%s212 + $0x110] sm:$0xff]
                  %251 = vst [vmem:[%s213 + $0x90] sm:$0xff] %v250
                  %v252 = vld [vmem:[%s212 + $0x118] sm:$0xff]
                  %253 = vst [vmem:[%s213 + $0x98] sm:$0xff] %v252
                  %v254 = vld [vmem:[%s212 + $0x120] sm:$0xff]
                  %255 = vst [vmem:[%s213 + $0xa0] sm:$0xff] %v254
                  %v256 = vld [vmem:[%s212 + $0x128] sm:$0xff]
                  %257 = vst [vmem:[%s213 + $0xa8] sm:$0xff] %v256
                  %v258 = vld [vmem:[%s212 + $0x130] sm:$0xff]
                  %259 = vst [vmem:[%s213 + $0xb0] sm:$0xff] %v258
                  %v260 = vld [vmem:[%s212 + $0x138] sm:$0xff]
                  %261 = vst [vmem:[%s213 + $0xb8] sm:$0xff] %v260
                  %v262 = vld [vmem:[%s212 + $0x180] sm:$0xff]
                  %263 = vst [vmem:[%s213 + $0xc0] sm:$0xff] %v262
                  %v264 = vld [vmem:[%s212 + $0x188] sm:$0xff]
                  %265 = vst [vmem:[%s213 + $0xc8] sm:$0xff] %v264
                  %v266 = vld [vmem:[%s212 + $0x190] sm:$0xff]
                  %267 = vst [vmem:[%s213 + $0xd0] sm:$0xff] %v266
                  %v268 = vld [vmem:[%s212 + $0x198] sm:$0xff]
                  %269 = vst [vmem:[%s213 + $0xd8] sm:$0xff] %v268
                  %v270 = vld [vmem:[%s212 + $0x1a0] sm:$0xff]
                  %271 = vst [vmem:[%s213 + $0xe0] sm:$0xff] %v270
                  %v272 = vld [vmem:[%s212 + $0x1a8] sm:$0xff]
                  %273 = vst [vmem:[%s213 + $0xe8] sm:$0xff] %v272
                  %v274 = vld [vmem:[%s212 + $0x1b0] sm:$0xff]
                  %275 = vst [vmem:[%s213 + $0xf0] sm:$0xff] %v274
                  %v276 = vld [vmem:[%s212 + $0x1b8] sm:$0xff]
                  %277 = vst [vmem:[%s213 + $0xf8] sm:$0xff] %v276
                $region52: #{tpu_custom_call.1} parent=46 // loop_footer
                  %s211 = sadd.s32 1, %s207
                $region53: #{tpu_custom_call.1} parent=46 // loop_footer_branch
                  %206 = sbr.rel target = $region49
                $region54: #{tpu_custom_call.1} parent=46 // loop_exit
                  _
              $region47: #{tpu_custom_call.1} parent=31 // pred_fallthru
                _
              // Predicated region
              $region55: #{tpu_custom_call.1} parent=31 // pred_check
                _
              $region56: #{tpu_custom_call.1} parent=31 // pred_check_branch
                %279 = sbr.rel target = $region58
              $region57: #{tpu_custom_call.1} parent=31 // pred_region
                _
              $region58: #{tpu_custom_call.1} parent=31 // pred_fallthru
                _
            $region32: #{tpu_custom_call.1} parent=27 // pred_fallthru
              _
            // Predicated region
            $region33: #{tpu_custom_call.1} parent=27 // pred_check
              _
            $region34: #{tpu_custom_call.1} parent=27 // pred_check_branch
              %129 = sbr.rel target = $region36
            $region35: #{tpu_custom_call.1} parent=27 // pred_region
              %s131 = ssub.s32 256, 1
              loop: start=0, step=1, limit=1
              $region37: #{tpu_custom_call.1} parent=35 // loop_pre_header
                _
              $region38: #{tpu_custom_call.1} parent=35 // loop_header
                %s133 = sphi 0, %s137
                %p134 = scmp.ge.s32.totalorder %s133, 1
                %s138 = sphi %s123, %s123
                %s139 = sphi %s120, %s120
              $region39: #{tpu_custom_call.1} parent=35 // loop_header_branch
                %136 = sbr.rel (%p134) target = $region43
              $region40: #{tpu_custom_call.1} parent=35 // loop_body
                %v140 = vld [vmem:[%s138] sm:%s131]
                %141 = vst [vmem:[%s139] sm:%s131] %v140
                %v142 = vld [vmem:[%s138 + $0x8] sm:%s131]
                %143 = vst [vmem:[%s139 + $0x8] sm:%s131] %v142
                %v144 = vld [vmem:[%s138 + $0x10] sm:%s131]
                %145 = vst [vmem:[%s139 + $0x10] sm:%s131] %v144
                %v146 = vld [vmem:[%s138 + $0x18] sm:%s131]
                %147 = vst [vmem:[%s139 + $0x18] sm:%s131] %v146
                %v148 = vld [vmem:[%s138 + $0x20] sm:%s131]
                %149 = vst [vmem:[%s139 + $0x20] sm:%s131] %v148
                %v150 = vld [vmem:[%s138 + $0x28] sm:%s131]
                %151 = vst [vmem:[%s139 + $0x28] sm:%s131] %v150
                %v152 = vld [vmem:[%s138 + $0x30] sm:%s131]
                %153 = vst [vmem:[%s139 + $0x30] sm:%s131] %v152
                %v154 = vld [vmem:[%s138 + $0x38] sm:%s131]
                %155 = vst [vmem:[%s139 + $0x38] sm:%s131] %v154
                %v156 = vld [vmem:[%s138 + $0x80] sm:%s131]
                %157 = vst [vmem:[%s139 + $0x40] sm:%s131] %v156
                %v158 = vld [vmem:[%s138 + $0x88] sm:%s131]
                %159 = vst [vmem:[%s139 + $0x48] sm:%s131] %v158
                %v160 = vld [vmem:[%s138 + $0x90] sm:%s131]
                %161 = vst [vmem:[%s139 + $0x50] sm:%s131] %v160
                %v162 = vld [vmem:[%s138 + $0x98] sm:%s131]
                %163 = vst [vmem:[%s139 + $0x58] sm:%s131] %v162
                %v164 = vld [vmem:[%s138 + $0xa0] sm:%s131]
                %165 = vst [vmem:[%s139 + $0x60] sm:%s131] %v164
                %v166 = vld [vmem:[%s138 + $0xa8] sm:%s131]
                %167 = vst [vmem:[%s139 + $0x68] sm:%s131] %v166
                %v168 = vld [vmem:[%s138 + $0xb0] sm:%s131]
                %169 = vst [vmem:[%s139 + $0x70] sm:%s131] %v168
                %v170 = vld [vmem:[%s138 + $0xb8] sm:%s131]
                %171 = vst [vmem:[%s139 + $0x78] sm:%s131] %v170
                %v172 = vld [vmem:[%s138 + $0x100] sm:%s131]
                %173 = vst [vmem:[%s139 + $0x80] sm:%s131] %v172
                %v174 = vld [vmem:[%s138 + $0x108] sm:%s131]
                %175 = vst [vmem:[%s139 + $0x88] sm:%s131] %v174
                %v176 = vld [vmem:[%s138 + $0x110] sm:%s131]
                %177 = vst [vmem:[%s139 + $0x90] sm:%s131] %v176
                %v178 = vld [vmem:[%s138 + $0x118] sm:%s131]
                %179 = vst [vmem:[%s139 + $0x98] sm:%s131] %v178
                %v180 = vld [vmem:[%s138 + $0x120] sm:%s131]
                %181 = vst [vmem:[%s139 + $0xa0] sm:%s131] %v180
                %v182 = vld [vmem:[%s138 + $0x128] sm:%s131]
                %183 = vst [vmem:[%s139 + $0xa8] sm:%s131] %v182
                %v184 = vld [vmem:[%s138 + $0x130] sm:%s131]
                %185 = vst [vmem:[%s139 + $0xb0] sm:%s131] %v184
                %v186 = vld [vmem:[%s138 + $0x138] sm:%s131]
                %187 = vst [vmem:[%s139 + $0xb8] sm:%s131] %v186
                %v188 = vld [vmem:[%s138 + $0x180] sm:%s131]
                %189 = vst [vmem:[%s139 + $0xc0] sm:%s131] %v188
                %v190 = vld [vmem:[%s138 + $0x188] sm:%s131]
                %191 = vst [vmem:[%s139 + $0xc8] sm:%s131] %v190
                %v192 = vld [vmem:[%s138 + $0x190] sm:%s131]
                %193 = vst [vmem:[%s139 + $0xd0] sm:%s131] %v192
                %v194 = vld [vmem:[%s138 + $0x198] sm:%s131]
                %195 = vst [vmem:[%s139 + $0xd8] sm:%s131] %v194
                %v196 = vld [vmem:[%s138 + $0x1a0] sm:%s131]
                %197 = vst [vmem:[%s139 + $0xe0] sm:%s131] %v196
                %v198 = vld [vmem:[%s138 + $0x1a8] sm:%s131]
                %199 = vst [vmem:[%s139 + $0xe8] sm:%s131] %v198
                %v200 = vld [vmem:[%s138 + $0x1b0] sm:%s131]
                %201 = vst [vmem:[%s139 + $0xf0] sm:%s131] %v200
                %v202 = vld [vmem:[%s138 + $0x1b8] sm:%s131]
                %203 = vst [vmem:[%s139 + $0xf8] sm:%s131] %v202
              $region41: #{tpu_custom_call.1} parent=35 // loop_footer
                %s137 = sadd.s32 1, %s133
              $region42: #{tpu_custom_call.1} parent=35 // loop_footer_branch
                %132 = sbr.rel target = $region38
              $region43: #{tpu_custom_call.1} parent=35 // loop_exit
                _
            $region36: #{tpu_custom_call.1} parent=27 // pred_fallthru
              _
          $region28: #{tpu_custom_call.1} parent=23 // pred_fallthru
            _
          %280 = vnop
        $region24: #{tpu_custom_call.1} parent=15 // pred_fallthru
          _
      $region16: #{tpu_custom_call.1} parent=5 // pred_fallthru
        _
      %p281 = scmp.le.s32.totalorder 1, %s8
      %p282 = scmp.lt.s32.totalorder %s8, 3
      %p283 = pnand %p281, %p282
      %p284 = pneg %p283
      // Predicated region
      $region59: #{tpu_custom_call.1} parent=5 // pred_check
        _
      $region60: #{tpu_custom_call.1} parent=5 // pred_check_branch
        %286 = sbr.rel (%p283) target = $region62
      $region61: #{tpu_custom_call.1} parent=5 // pred_region
        %s287 = ssub.s32 %s8, 1
        %s288 = sand.u32 %s47, 1
        %s289 = sand.u32 %s47, 1
        %s290 = smul.addr %s289, 256
        %s291 = scalar_lea.vmem [#allocation2], %s290
        // Predicated region
        $region63: #{tpu_custom_call.1} parent=61 // pred_check
          %p292 = pneg %p60
        $region64: #{tpu_custom_call.1} parent=61 // pred_check_branch
          %294 = sbr.rel (%p292) target = $region66
        $region65: #{tpu_custom_call.1} parent=61 // pred_region
          _
        $region66: #{tpu_custom_call.1} parent=61 // pred_fallthru
          _
        %s295 = smul.u32 8, %s13
        %p296 = scmp.lt.s32.totalorder %s295, 15
        %s297 = scalar_select %p296, %s295, 15
        %s298 = smul.addr %s297, 8
        %s299 = scalar_lea.vmem %s0, %s298
        %p300 = pneg %p34
        %p301 = pneg %p31
        %s302 = sand.u32 %s47, 1
        %s303 = sand.u32 %s47, 1
        %s304 = smul.addr %s303, 256
        %s305 = scalar_lea.vmem [#allocation2], %s304
        %p306 = pneg %p60
        %p307 = pneg %p57
        %p308 = pneg %p86
        %p309 = pneg %p83
        %s310 = smul.u32 8, %s13
        %p311 = scmp.lt.s32.totalorder %s310, 15
        %s312 = scalar_select %p311, %s310, 15
        %s313 = smul.addr %s312, 8
        %s314 = scalar_lea.vmem %s2, %s313
        %s315 = smul.u32 8, %s13
        %p316 = scmp.lt.s32.totalorder %s315, 15
        %s317 = scalar_select %p316, %s315, 15
        %s318 = smul.addr %s317, 8
        %s319 = scalar_lea.vmem %s0, %s318
        %s320 = smul.u32 8, %s13
        %s321 = smul.u32 8, %s13
        %s322 = smul.u32 8, %s13
        %p323 = scmp.lt.s32.totalorder %s322, 15
        %s324 = scalar_select %p323, %s322, 15
        %s325 = smul.addr %s324, 8
        %s326 = scalar_lea.vmem %s2, %s325
        %s327 = smul.u32 8, %s13
        %v328 = vld [vmem:[%s319] sm:$0xff]
        %v329 = vld [vmem:[%s319 + $0x8] sm:$0xff]
        %v330 = vld [vmem:[%s319 + $0x10] sm:$0xff]
        %v331 = vld [vmem:[%s319 + $0x18] sm:$0xff]
        %v332 = vld [vmem:[%s319 + $0x20] sm:$0xff]
        %v333 = vld [vmem:[%s319 + $0x28] sm:$0xff]
        %v334 = vld [vmem:[%s319 + $0x30] sm:$0xff]
        %v335 = vld [vmem:[%s319 + $0x38] sm:$0xff]
        %vm336 = vcmp.ge.s32.totalorder %v328, 0
        %vm337 = vcmp.ge.s32.totalorder %v329, 0
        %vm338 = vcmp.ge.s32.totalorder %v330, 0
        %vm339 = vcmp.ge.s32.totalorder %v331, 0
        %vm340 = vcmp.ge.s32.totalorder %v332, 0
        %vm341 = vcmp.ge.s32.totalorder %v333, 0
        %vm342 = vcmp.ge.s32.totalorder %v334, 0
        %vm343 = vcmp.ge.s32.totalorder %v335, 0
        %v344 = vsel %vm336, 1, 0
        %v345 = vsel %vm337, 1, 0
        %v346 = vsel %vm338, 1, 0
        %v347 = vsel %vm339, 1, 0
        %v348 = vsel %vm340, 1, 0
        %v349 = vsel %vm341, 1, 0
        %v350 = vsel %vm342, 1, 0
        %v351 = vsel %vm343, 1, 0
        %v352 = vcvt.s32.f32 %v344
        %v353 = vcvt.s32.f32 %v345
        %v354 = vcvt.s32.f32 %v346
        %v355 = vcvt.s32.f32 %v347
        %v356 = vcvt.s32.f32 %v348
        %v357 = vcvt.s32.f32 %v349
        %v358 = vcvt.s32.f32 %v350
        %v359 = vcvt.s32.f32 %v351
        %vm360 = vcmask 31744
        %v361 = vsel %vm360, %v352, 0.0
        %362 = vadd.xlane.f32.xlu0 %v361
        %v363 = vpop.xlane.xlu0 %362
        %v364 = vsel %vm360, %v353, 0.0
        %365 = vadd.xlane.f32.xlu0 %v364
        %v366 = vpop.xlane.xlu0 %365
        %v367 = vsel %vm360, %v354, 0.0
        %368 = vadd.xlane.f32.xlu0 %v367
        %v369 = vpop.xlane.xlu0 %368
        %v370 = vsel %vm360, %v355, 0.0
        %371 = vadd.xlane.f32.xlu0 %v370
        %v372 = vpop.xlane.xlu0 %371
        %v373 = vsel %vm360, %v356, 0.0
        %374 = vadd.xlane.f32.xlu0 %v373
        %v375 = vpop.xlane.xlu0 %374
        %v376 = vsel %vm360, %v357, 0.0
        %377 = vadd.xlane.f32.xlu0 %v376
        %v378 = vpop.xlane.xlu0 %377
        %v379 = vsel %vm360, %v358, 0.0
        %380 = vadd.xlane.f32.xlu0 %v379
        %v381 = vpop.xlane.xlu0 %380
        %v382 = vsel %vm360, %v359, 0.0
        %383 = vadd.xlane.f32.xlu0 %v382
        %v384 = vpop.xlane.xlu0 %383
        %v385 = vld [vmem:[%s291] sm:$0xff]
        %v386 = vld [vmem:[%s291 + $0x8] sm:$0xff]
        %v387 = vld [vmem:[%s291 + $0x10] sm:$0xff]
        %v388 = vld [vmem:[%s291 + $0x18] sm:$0xff]
        %v389 = vld [vmem:[%s291 + $0x20] sm:$0xff]
        %v390 = vld [vmem:[%s291 + $0x28] sm:$0xff]
        %v391 = vld [vmem:[%s291 + $0x30] sm:$0xff]
        %v392 = vld [vmem:[%s291 + $0x38] sm:$0xff]
        %393 = vset.pattern.permute.xlu0 0
        %394 = vperm.xlu0 %393, %v344
        %v395 = vpop.permute.xlu0 %394
        %396 = vset.pattern.permute.xlu0 0
        %397 = vperm.xlu0 %396, %v345
        %v398 = vpop.permute.xlu0 %397
        %399 = vset.pattern.permute.xlu0 0
        %400 = vperm.xlu0 %399, %v346
        %v401 = vpop.permute.xlu0 %400
        %402 = vset.pattern.permute.xlu0 0
        %403 = vperm.xlu0 %402, %v347
        %v404 = vpop.permute.xlu0 %403
        %405 = vset.pattern.permute.xlu0 0
        %406 = vperm.xlu0 %405, %v348
        %v407 = vpop.permute.xlu0 %406
        %408 = vset.pattern.permute.xlu0 0
        %409 = vperm.xlu0 %408, %v349
        %v410 = vpop.permute.xlu0 %409
        %411 = vset.pattern.permute.xlu0 0
        %412 = vperm.xlu0 %411, %v350
        %v413 = vpop.permute.xlu0 %412
        %414 = vset.pattern.permute.xlu0 0
        %415 = vperm.xlu0 %414, %v351
        %v416 = vpop.permute.xlu0 %415
        %vm417 = vcmp.eq.s32.totalorder %v395, 1
        %vm418 = vcmp.eq.s32.totalorder %v398, 1
        %vm419 = vcmp.eq.s32.totalorder %v401, 1
        %vm420 = vcmp.eq.s32.totalorder %v404, 1
        %vm421 = vcmp.eq.s32.totalorder %v407, 1
        %vm422 = vcmp.eq.s32.totalorder %v410, 1
        %vm423 = vcmp.eq.s32.totalorder %v413, 1
        %vm424 = vcmp.eq.s32.totalorder %v416, 1
        %v425 = vsel %vm417, %v385, 0.0
        %v426 = vsel %vm418, %v386, 0.0
        %v427 = vsel %vm419, %v387, 0.0
        %v428 = vsel %vm420, %v388, 0.0
        %v429 = vsel %vm421, %v389, 0.0
        %v430 = vsel %vm422, %v390, 0.0
        %v431 = vsel %vm423, %v391, 0.0
        %v432 = vsel %vm424, %v392, 0.0
        %v433 = vadd.f32 %v425, 0.0
        %v434 = vadd.f32 %v426, 0.0
        %v435 = vadd.f32 %v427, 0.0
        %v436 = vadd.f32 %v428, 0.0
        %v437 = vadd.f32 %v429, 0.0
        %v438 = vadd.f32 %v430, 0.0
        %v439 = vadd.f32 %v431, 0.0
        %v440 = vadd.f32 %v432, 0.0
        %s441 = scalar_lea.vmem %s291, 64 [#allocation2]
        %v442 = vld [vmem:[%s441] sm:$0xff]
        %v443 = vld [vmem:[%s441 + $0x8] sm:$0xff]
        %v444 = vld [vmem:[%s441 + $0x10] sm:$0xff]
        %v445 = vld [vmem:[%s441 + $0x18] sm:$0xff]
        %v446 = vld [vmem:[%s441 + $0x20] sm:$0xff]
        %v447 = vld [vmem:[%s441 + $0x28] sm:$0xff]
        %v448 = vld [vmem:[%s441 + $0x30] sm:$0xff]
        %v449 = vld [vmem:[%s441 + $0x38] sm:$0xff]
        %450 = vset.pattern.permute.xlu0 1
        %451 = vperm.xlu0 %450, %v344
        %v452 = vpop.permute.xlu0 %451
        %453 = vset.pattern.permute.xlu0 1
        %454 = vperm.xlu0 %453, %v345
        %v455 = vpop.permute.xlu0 %454
        %456 = vset.pattern.permute.xlu0 1
        %457 = vperm.xlu0 %456, %v346
        %v458 = vpop.permute.xlu0 %457
        %459 = vset.pattern.permute.xlu0 1
        %460 = vperm.xlu0 %459, %v347
        %v461 = vpop.permute.xlu0 %460
        %462 = vset.pattern.permute.xlu0 1
        %463 = vperm.xlu0 %462, %v348
        %v464 = vpop.permute.xlu0 %463
        %465 = vset.pattern.permute.xlu0 1
        %466 = vperm.xlu0 %465, %v349
        %v467 = vpop.permute.xlu0 %466
        %468 = vset.pattern.permute.xlu0 1
        %469 = vperm.xlu0 %468, %v350
        %v470 = vpop.permute.xlu0 %469
        %471 = vset.pattern.permute.xlu0 1
        %472 = vperm.xlu0 %471, %v351
        %v473 = vpop.permute.xlu0 %472
        %vm474 = vcmp.eq.s32.totalorder %v452, 1
        %vm475 = vcmp.eq.s32.totalorder %v455, 1
        %vm476 = vcmp.eq.s32.totalorder %v458, 1
        %vm477 = vcmp.eq.s32.totalorder %v461, 1
        %vm478 = vcmp.eq.s32.totalorder %v464, 1
        %vm479 = vcmp.eq.s32.totalorder %v467, 1
        %vm480 = vcmp.eq.s32.totalorder %v470, 1
        %vm481 = vcmp.eq.s32.totalorder %v473, 1
        %v482 = vsel %vm474, %v442, 0.0
        %v483 = vsel %vm475, %v443, 0.0
        %v484 = vsel %vm476, %v444, 0.0
        %v485 = vsel %vm477, %v445, 0.0
        %v486 = vsel %vm478, %v446, 0.0
        %v487 = vsel %vm479, %v447, 0.0
        %v488 = vsel %vm480, %v448, 0.0
        %v489 = vsel %vm481, %v449, 0.0
        %v490 = vadd.f32 %v433, %v482
        %v491 = vadd.f32 %v434, %v483
        %v492 = vadd.f32 %v435, %v484
        %v493 = vadd.f32 %v436, %v485
        %v494 = vadd.f32 %v437, %v486
        %v495 = vadd.f32 %v438, %v487
        %v496 = vadd.f32 %v439, %v488
        %v497 = vadd.f32 %v440, %v489
        %s498 = scalar_lea.vmem %s291, 128 [#allocation2]
        %v499 = vld [vmem:[%s498] sm:$0xff]
        %v500 = vld [vmem:[%s498 + $0x8] sm:$0xff]
        %v501 = vld [vmem:[%s498 + $0x10] sm:$0xff]
        %v502 = vld [vmem:[%s498 + $0x18] sm:$0xff]
        %v503 = vld [vmem:[%s498 + $0x20] sm:$0xff]
        %v504 = vld [vmem:[%s498 + $0x28] sm:$0xff]
        %v505 = vld [vmem:[%s498 + $0x30] sm:$0xff]
        %v506 = vld [vmem:[%s498 + $0x38] sm:$0xff]
        %507 = vset.pattern.permute.xlu0 2
        %508 = vperm.xlu0 %507, %v344
        %v509 = vpop.permute.xlu0 %508
        %510 = vset.pattern.permute.xlu0 2
        %511 = vperm.xlu0 %510, %v345
        %v512 = vpop.permute.xlu0 %511
        %513 = vset.pattern.permute.xlu0 2
        %514 = vperm.xlu0 %513, %v346
        %v515 = vpop.permute.xlu0 %514
        %516 = vset.pattern.permute.xlu0 2
        %517 = vperm.xlu0 %516, %v347
        %v518 = vpop.permute.xlu0 %517
        %519 = vset.pattern.permute.xlu0 2
        %520 = vperm.xlu0 %519, %v348
        %v521 = vpop.permute.xlu0 %520
        %522 = vset.pattern.permute.xlu0 2
        %523 = vperm.xlu0 %522, %v349
        %v524 = vpop.permute.xlu0 %523
        %525 = vset.pattern.permute.xlu0 2
        %526 = vperm.xlu0 %525, %v350
        %v527 = vpop.permute.xlu0 %526
        %528 = vset.pattern.permute.xlu0 2
        %529 = vperm.xlu0 %528, %v351
        %v530 = vpop.permute.xlu0 %529
        %vm531 = vcmp.eq.s32.totalorder %v509, 1
        %vm532 = vcmp.eq.s32.totalorder %v512, 1
        %vm533 = vcmp.eq.s32.totalorder %v515, 1
        %vm534 = vcmp.eq.s32.totalorder %v518, 1
        %vm535 = vcmp.eq.s32.totalorder %v521, 1
        %vm536 = vcmp.eq.s32.totalorder %v524, 1
        %vm537 = vcmp.eq.s32.totalorder %v527, 1
        %vm538 = vcmp.eq.s32.totalorder %v530, 1
        %v539 = vsel %vm531, %v499, 0.0
        %v540 = vsel %vm532, %v500, 0.0
        %v541 = vsel %vm533, %v501, 0.0
        %v542 = vsel %vm534, %v502, 0.0
        %v543 = vsel %vm535, %v503, 0.0
        %v544 = vsel %vm536, %v504, 0.0
        %v545 = vsel %vm537, %v505, 0.0
        %v546 = vsel %vm538, %v506, 0.0
        %v547 = vadd.f32 %v490, %v539
        %v548 = vadd.f32 %v491, %v540
        %v549 = vadd.f32 %v492, %v541
        %v550 = vadd.f32 %v493, %v542
        %v551 = vadd.f32 %v494, %v543
        %v552 = vadd.f32 %v495, %v544
        %v553 = vadd.f32 %v496, %v545
        %v554 = vadd.f32 %v497, %v546
        %s555 = scalar_lea.vmem %s291, 192 [#allocation2]
        %v556 = vld [vmem:[%s555] sm:$0xff]
        %v557 = vld [vmem:[%s555 + $0x8] sm:$0xff]
        %v558 = vld [vmem:[%s555 + $0x10] sm:$0xff]
        %v559 = vld [vmem:[%s555 + $0x18] sm:$0xff]
        %v560 = vld [vmem:[%s555 + $0x20] sm:$0xff]
        %v561 = vld [vmem:[%s555 + $0x28] sm:$0xff]
        %v562 = vld [vmem:[%s555 + $0x30] sm:$0xff]
        %v563 = vld [vmem:[%s555 + $0x38] sm:$0xff]
        %564 = vset.pattern.permute.xlu0 3
        %565 = vperm.xlu0 %564, %v344
        %v566 = vpop.permute.xlu0 %565
        %567 = vset.pattern.permute.xlu0 3
        %568 = vperm.xlu0 %567, %v345
        %v569 = vpop.permute.xlu0 %568
        %570 = vset.pattern.permute.xlu0 3
        %571 = vperm.xlu0 %570, %v346
        %v572 = vpop.permute.xlu0 %571
        %573 = vset.pattern.permute.xlu0 3
        %574 = vperm.xlu0 %573, %v347
        %v575 = vpop.permute.xlu0 %574
        %576 = vset.pattern.permute.xlu0 3
        %577 = vperm.xlu0 %576, %v348
        %v578 = vpop.permute.xlu0 %577
        %579 = vset.pattern.permute.xlu0 3
        %580 = vperm.xlu0 %579, %v349
        %v581 = vpop.permute.xlu0 %580
        %582 = vset.pattern.permute.xlu0 3
        %583 = vperm.xlu0 %582, %v350
        %v584 = vpop.permute.xlu0 %583
        %585 = vset.pattern.permute.xlu0 3
        %586 = vperm.xlu0 %585, %v351
        %v587 = vpop.permute.xlu0 %586
        %vm588 = vcmp.eq.s32.totalorder %v566, 1
        %vm589 = vcmp.eq.s32.totalorder %v569, 1
        %vm590 = vcmp.eq.s32.totalorder %v572, 1
        %vm591 = vcmp.eq.s32.totalorder %v575, 1
        %vm592 = vcmp.eq.s32.totalorder %v578, 1
        %vm593 = vcmp.eq.s32.totalorder %v581, 1
        %vm594 = vcmp.eq.s32.totalorder %v584, 1
        %vm595 = vcmp.eq.s32.totalorder %v587, 1
        %v596 = vsel %vm588, %v556, 0.0
        %v597 = vsel %vm589, %v557, 0.0
        %v598 = vsel %vm590, %v558, 0.0
        %v599 = vsel %vm591, %v559, 0.0
        %v600 = vsel %vm592, %v560, 0.0
        %v601 = vsel %vm593, %v561, 0.0
        %v602 = vsel %vm594, %v562, 0.0
        %v603 = vsel %vm595, %v563, 0.0
        %v604 = vadd.f32 %v547, %v596
        %v605 = vadd.f32 %v548, %v597
        %v606 = vadd.f32 %v549, %v598
        %v607 = vadd.f32 %v550, %v599
        %v608 = vadd.f32 %v551, %v600
        %v609 = vadd.f32 %v552, %v601
        %v610 = vadd.f32 %v553, %v602
        %v611 = vadd.f32 %v554, %v603
        %v612 = vmax.f32 %v363, 1.0
        %v613 = vmax.f32 %v366, 1.0
        %v614 = vmax.f32 %v369, 1.0
        %v615 = vmax.f32 %v372, 1.0
        %v616 = vmax.f32 %v375, 1.0
        %v617 = vmax.f32 %v378, 1.0
        %v618 = vmax.f32 %v381, 1.0
        %v619 = vmax.f32 %v384, 1.0
        %v620 = vrcp.pop %v612
        %v621 = vrcp.pop %v613
        %v622 = vrcp.pop %v614
        %v623 = vrcp.pop %v615
        %v624 = vrcp.pop %v616
        %v625 = vrcp.pop %v617
        %v626 = vrcp.pop %v618
        %v627 = vrcp.pop %v619
        %v628 = vmul.f32 %v604, %v620
        %v629 = vmul.f32 %v605, %v621
        %v630 = vmul.f32 %v606, %v622
        %v631 = vmul.f32 %v607, %v623
        %v632 = vmul.f32 %v608, %v624
        %v633 = vmul.f32 %v609, %v625
        %v634 = vmul.f32 %v610, %v626
        %v635 = vmul.f32 %v611, %v627
        %vm636 = vcmask 48128
        %637 = vst.msk [vmem:[%s326] sm:$0xff] %vm636, %v628
        %638 = vst.msk [vmem:[%s326 + $0x8] sm:$0xff] %vm636, %v629
        %639 = vst.msk [vmem:[%s326 + $0x10] sm:$0xff] %vm636, %v630
        %640 = vst.msk [vmem:[%s326 + $0x18] sm:$0xff] %vm636, %v631
        %641 = vst.msk [vmem:[%s326 + $0x20] sm:$0xff] %vm636, %v632
        %642 = vst.msk [vmem:[%s326 + $0x28] sm:$0xff] %vm636, %v633
        %643 = vst.msk [vmem:[%s326 + $0x30] sm:$0xff] %vm636, %v634
        %644 = vst.msk [vmem:[%s326 + $0x38] sm:$0xff] %vm636, %v635
        %s645 = smul.u32 8, %s13
        %p646 = scmp.lt.s32.totalorder %s645, 15
        %s647 = scalar_select %p646, %s645, 15
        %s648 = smul.addr %s647, 8
        %s649 = scalar_lea.vmem %s2, %s648
        // Predicated region
        $region67: #{tpu_custom_call.1} parent=61 // pred_check
          %p650 = pneg %p83
        $region68: #{tpu_custom_call.1} parent=61 // pred_check_branch
          %652 = sbr.rel (%p650) target = $region70
        $region69: #{tpu_custom_call.1} parent=61 // pred_region
          %s653 = smul.u32 8, %s13
        $region70: #{tpu_custom_call.1} parent=61 // pred_fallthru
          _
      $region62: #{tpu_custom_call.1} parent=5 // pred_fallthru
        _
      %p654 = scmp.le.s32.totalorder 2, %s8
      // Predicated region
      $region71: #{tpu_custom_call.1} parent=5 // pred_check
        %p655 = pneg %p654
      $region72: #{tpu_custom_call.1} parent=5 // pred_check_branch
        %657 = sbr.rel (%p655) target = $region74
      $region73: #{tpu_custom_call.1} parent=5 // pred_region
        %s658 = ssub.s32 %s8, 2
        // Predicated region
        $region75: #{tpu_custom_call.1} parent=73 // pred_check
          %p659 = pneg %p89
        $region76: #{tpu_custom_call.1} parent=73 // pred_check_branch
          %661 = sbr.rel (%p659) target = $region78
        $region77: #{tpu_custom_call.1} parent=73 // pred_region
          %s662 = smul.u32 8, %s14
          %p663 = scmp.lt.s32.totalorder %s662, 15
          %s664 = scalar_select %p663, %s662, 15
          %s665 = smul.addr %s664, 8
          %s666 = scalar_lea.vmem %s2, %s665
        $region78: #{tpu_custom_call.1} parent=73 // pred_fallthru
          _
      $region74: #{tpu_custom_call.1} parent=5 // pred_fallthru
        _
    $region6: #{tpu_custom_call.1} parent=1 // loop_footer
      %s12 = sadd.s32 1, %s8
    $region7: #{tpu_custom_call.1} parent=1 // loop_footer_branch
      %7 = sbr.rel target = $region3
    $region8: #{tpu_custom_call.1} parent=1 // loop_exit
      _

</llo_original>
